<compile_context>
chip_gen: v6e
topology: v6e:2x2x1
jax: 0.10.0
libtpu: 0.0.40
codegen_flags: <defaults>
</compile_context>

<pallas_src>
import math
import numpy as np
import jax
import jax.numpy as jnp
from jax.experimental import pallas as pl
from jax.experimental.pallas import tpu as pltpu

LANE = 128     # TPU lane width (minor dim tiling)
SUBLANE = 8    # TPU sublane width (second-minor dim tiling)


def _round_up(x, m):
    return ((x + m - 1) // m) * m


# ---------------------------------------------------------------------------
# Generic tiled matmul kernel: M "parallel" axis, K "arbitrary" reduction axis
# with an f32 VMEM accumulator.
# ---------------------------------------------------------------------------
def _mm_kernel(a_ref, b_ref, o_ref, acc_ref):
    k = pl.program_id(1)

    @pl.when(k == 0)
    def _init():
        acc_ref[...] = jnp.zeros_like(acc_ref)

    acc_ref[...] += jnp.dot(
        a_ref[...].astype(jnp.float32),
        b_ref[...].astype(jnp.float32),
        preferred_element_type=jnp.float32,
    )

    @pl.when(k == pl.num_programs(1) - 1)
    def _store():
        o_ref[...] = acc_ref[...].astype(o_ref.dtype)


def _pick_tiles(M, K, a_itemsize):
    """Choose (tm, tk) block sizes for an (M, K) @ (K, N) matmul."""
    # --- K (reduction) tile: whole K when small; else the largest 128-lane
    # aligned divisor of K not exceeding ~8K columns (bounded VMEM, no ragged
    # reduction tail that would accumulate garbage).
    max_tk = 8192
    if K <= max_tk:
        tk = K
    else:
        tk = K  # TODO(synk): mask a ragged K tail instead of this whole-K fallback.
        t = (max_tk // LANE) * LANE
        while t >= LANE:
            if K % t == 0:
                tk = t
                break
            t -= LANE
    # --- M tile: aim for >=4-8 MB of A per grid step (amortizes the ~0.35us
    # per-step overhead, matters most on v7x's 3.2 TB/s HBM), multiple of 8.
    tm = (8 << 20) // max(1, tk * a_itemsize)
    tm = max(SUBLANE, min(1024, tm))
    tm = (tm // SUBLANE) * SUBLANE
    if M > 8 * SUBLANE:
        # Keep at least two "parallel" M blocks so megacore (v7x: 2 TCs) can
        # shard the grid; neutral on v5e/v6e.
        half = _round_up((M + 1) // 2, SUBLANE)
        tm = min(tm, half)
    if M <= tm:
        tm = M  # single full-extent block (always a legal block shape)
    return tm, tk


def pallas_matmul(a, b, *, out_dtype=jnp.float32):
    """(M, K) @ (K, N) -> (M, N) f32, M-parallel / K-reduction tiled."""
    M, K = a.shape
    K2, n_out = b.shape
    assert K == K2

    tm, tk = _pick_tiles(M, K, a.dtype.itemsize)
    grid = (pl.cdiv(M, tm), pl.cdiv(K, tk))

    a_item = a.dtype.itemsize
    b_item = b.dtype.itemsize
    o_item = jnp.dtype(out_dtype).itemsize
    # Double-buffered A, B, out blocks + f32 accumulator scratch.
    vmem_est = (2 * tm * tk * a_item + 2 * tk * n_out * b_item
                + 2 * tm * n_out * o_item + tm * n_out * 4)
    vmem_limit = int(min(max(3 * vmem_est // 2 + (4 << 20), 32 << 20), 56 << 20))

    cost = pl.CostEstimate(
        flops=2 * M * K * n_out,
        transcendentals=0,
        bytes_accessed=M * K * a_item + K * n_out * b_item + M * n_out * o_item,
    )

    return pl.pallas_call(
        _mm_kernel,
        out_shape=jax.ShapeDtypeStruct((M, n_out), out_dtype),
        grid_spec=pltpu.PrefetchScalarGridSpec(
            num_scalar_prefetch=0,
            grid=grid,
            in_specs=[pl.BlockSpec((tm, tk), lambda i, k: (i, k)),
                      pl.BlockSpec((tk, n_out), lambda i, k: (k, 0))],
            out_specs=pl.BlockSpec((tm, n_out), lambda i, k: (i, 0)),
            scratch_shapes=[pltpu.VMEM((tm, n_out), jnp.float32)],
        ),
        compiler_params=pltpu.CompilerParams(
            dimension_semantics=("parallel", "arbitrary"),
            vmem_limit_bytes=vmem_limit,
        ),
        cost_estimate=cost,
    )(a, b)


# ---------------------------------------------------------------------------
# Host-side constant operators (built once, cached).
# ---------------------------------------------------------------------------
def adaptive_avg_pool_matrix(H, W, th, tw):
    """adaptive_avg_pool2d as an (H*W, th*tw) linear operator (numpy).

    Bin boundaries match torch.nn.functional.adaptive_avg_pool2d:
      start = floor(i * H / out), end = ceil((i + 1) * H / out).
    """
    P = np.zeros((H * W, th * tw), dtype=np.float32)
    for i in range(th):
        h0 = (i * H) // th
        h1 = ((i + 1) * H + th - 1) // th
        for j in range(tw):
            w0 = (j * W) // tw
            w1 = ((j + 1) * W + tw - 1) // tw
            cnt = float((h1 - h0) * (w1 - w0))
            for h in range(h0, h1):
                for w in range(w0, w1):
                    P[h * W + w, i * tw + j] = 1.0 / cnt
    return P


class ImprintClassifierPallas:
    """JAX/Pallas equivalent of ImprintClassifier.forward (bias-free linear)."""

    def __init__(self, num_channels, num_classes=10, embedding_length=100):
        self.target_size = math.ceil(math.sqrt(embedding_length / num_channels))
        self.num_channels = num_channels
        self.num_classes = num_classes
        self.tt = self.target_size * self.target_size
        self.input_features = self.tt * num_channels
        self.num_classes_padded = _round_up(num_classes, LANE)
        # "imprinted" weights, PyTorch layout: (num_classes, input_features)
        self.weights = None
        self._wT_padded = None        # (input_features, ncls_pad) f32, lane-dense
        self._pool_mats = {}          # (H, W) -> (H*W, tt) f32
        self._fused_ops = {}          # (H, W) -> (C*H*W, ncls_pad) bf16

    # TODO(synk): imprint_weights (label-scatter averaging of pooled features)
    # is training-time host logic, not implemented as a kernel; weights are
    # installed via set_weights.
    def set_weights(self, weights):
        weights = jnp.asarray(weights, dtype=jnp.float32)
        assert weights.shape == (self.num_classes, self.input_features)
        self.weights = weights
        pad = self.num_classes_padded - self.num_classes
        wT = jnp.transpose(weights)                                # (in_feat, K)
        self._wT_padded = jnp.pad(wT, ((0, 0), (0, pad)))          # lane-dense
        self._fused_ops = {}                                       # invalidate

    def _pool_matrix(self, H, W):
        key = (H, W)
        P = self._pool_mats.get(key)
        if P is None:
            ts = self.target_size
            P = jnp.asarray(adaptive_avg_pool_matrix(H, W, ts, ts))
            self._pool_mats[key] = P
        return P

    def _fused_operator(self, H, W):
        """(C*H*W, ncls_pad) bf16 operator = per-channel pool composed with W.T."""
        key = (H, W)
        op = self._fused_ops.get(key)
        if op is None:
            ts = self.target_size
            P = adaptive_avg_pool_matrix(H, W, ts, ts)                  # (H*W, tt)
            Wr = np.asarray(self.weights).reshape(
                self.num_classes, self.num_channels, self.tt)           # (K, C, tt)
            # comb[(c, hw), k] = sum_t P[hw, t] * W[k, c, t]
            comb = np.einsum('ht,kct->chk', P, Wr).reshape(
                self.num_channels * H * W, self.num_classes)
            pad = self.num_classes_padded - self.num_classes
            comb = np.pad(comb, ((0, 0), (0, pad)))                     # lane-dense
            op = jnp.asarray(comb, dtype=jnp.bfloat16)
            self._fused_ops[key] = op
        return op

    def __call__(self, x):
        if self.weights is None:
            raise ValueError('Weights have not been imprinted.')
        if x.ndim == 4:
            N, C, H, W = x.shape
            assert C == self.num_channels
            K = C * H * W
            # HBM-traffic model: the fused single matmul re-reads a
            # (C*H*W, ncls_pad) bf16 operator every call; the two-step path
            # reads tiny P / W.T operands plus a small pooled round-trip that
            # grows with N.  Pick whichever moves fewer bytes.
            fused_bytes = K * self.num_classes_padded * 2
            twostep_bytes = (H * W * self.tt * 4
                             + self.input_features * self.num_classes_padded * 4
                             + 2 * N * C * self.tt * 4)
            if fused_bytes <= twostep_bytes:
                # Large batch: one matmul, x read once, constant-size operator.
                out = pallas_matmul(x.reshape(N, K), self._fused_operator(H, W))
            else:
                # Small batch: pool then linear, tiny VMEM-resident operands.
                P = self._pool_matrix(H, W)
                pooled = pallas_matmul(x.reshape(N * C, H * W), P)   # (N*C, tt)
                out = pallas_matmul(pooled.reshape(N, self.input_features),
                                    self._wT_padded)
        else:
            xf = x.reshape(x.shape[0], -1)
            assert xf.shape[1] == self.input_features
            out = pallas_matmul(xf, self._wT_padded)
        return out[:, :self.num_classes]


if __name__ == "__main__":
    key = jax.random.PRNGKey(0)
    k_x, k_w = jax.random.split(key)

    num_channels = 4
    num_classes = 10
    embedding_length = 100          # -> target_size = 5, input_features = 100
    N, H, W = 2, 16, 16

    model = ImprintClassifierPallas(num_channels, num_classes, embedding_length)
    model.set_weights(jax.random.normal(
        k_w, (num_classes, model.input_features), dtype=jnp.float32))

    x = jax.random.normal(k_x, (N, num_channels, H, W), dtype=jnp.float32)

    # Pure-JAX f32 reference of the unfused math.
    ts = model.target_size
    P_ref = jnp.asarray(adaptive_avg_pool_matrix(H, W, ts, ts))
    pooled_ref = (x.reshape(N * num_channels, H * W) @ P_ref).reshape(N, -1)
    ref = pooled_ref @ model.weights.T

    # 1) Small-batch 4-D path (pool kernel + linear kernel).
    out = jax.block_until_ready(model(x))
    assert out.shape == (N, num_classes)
    np.testing.assert_allclose(np.asarray(out), np.asarray(ref),
                               rtol=2e-2, atol=1e-1)

    # 2) Already-pooled (non-4D) path.
    out_pooled = jax.block_until_ready(model(pooled_ref))
    np.testing.assert_allclose(np.asarray(out_pooled), np.asarray(ref),
                               rtol=2e-2, atol=1e-1)

    # 3) Large-batch 4-D path (single fused-operator matmul, M+K tiled grid).
    N2 = 512
    x2 = jax.random.normal(jax.random.PRNGKey(1),
                           (N2, num_channels, H, W), dtype=jnp.float32)
    out2 = jax.block_until_ready(model(x2))
    pooled2 = (x2.reshape(N2 * num_channels, H * W) @ P_ref).reshape(N2, -1)
    ref2 = pooled2 @ model.weights.T
    assert out2.shape == (N2, num_classes)
    np.testing.assert_allclose(np.asarray(out2), np.asarray(ref2),
                               rtol=2e-2, atol=1e-1)

    print("KERNEL_OK")
</pallas_src>

<mosaic_0001>
module attributes {stable_mosaic.version = 11 : i64} {
  func.func @_mm_kernel(%arg0: i32, %arg1: i32, %arg2: memref<8x256xf32, #tpu.memory_space<vmem>>, %arg3: memref<256x25xf32, #tpu.memory_space<vmem>>, %arg4: memref<8x25xf32, #tpu.memory_space<vmem>>, %arg5: memref<8x25xf32, #tpu.memory_space<vmem>>) attributes {dimension_semantics = [#tpu.dimension_semantics<parallel>, #tpu.dimension_semantics<arbitrary>], iteration_bounds = array<i64: 1, 1>, scalar_prefetch = 0 : i64, scratch_operands = 1 : i64, tpu.core_type = #tpu.core_type<tc>, window_params = [{transform_indices = @transform_0, window_bounds = array<i64: 8, 256>}, {transform_indices = @transform_1, window_bounds = array<i64: 256, 25>}, {transform_indices = @transform_2, window_bounds = array<i64: 8, 25>}]} {
    %c0_i32 = arith.constant 0 : i32
    %0 = arith.cmpi eq, %arg1, %c0_i32 : i32
    %1 = arith.extui %0 : i1 to i32
    %c0_i32_0 = arith.constant 0 : i32
    %2 = arith.cmpi ne, %1, %c0_i32_0 : i32
    scf.if %2 {
      %cst_10 = arith.constant 0.000000e+00 : f32
      %12 = vector.broadcast %cst_10 : f32 to vector<8x25xf32>
      %c0_11 = arith.constant 0 : index
      %c0_12 = arith.constant 0 : index
      %13 = vector.load %arg5[%c0_11, %c0_12] : memref<8x25xf32, #tpu.memory_space<vmem>>, vector<8x25xf32>
      tpu.vector_store %arg5[%c0_11, %c0_12], %12 {strides = array<i32>} : memref<8x25xf32, #tpu.memory_space<vmem>>, vector<8x25xf32>,
    } else {
    }
    %c0 = arith.constant 0 : index
    %c0_1 = arith.constant 0 : index
    %3 = vector.load %arg5[%c0, %c0_1] : memref<8x25xf32, #tpu.memory_space<vmem>>, vector<8x25xf32>
    %c0_2 = arith.constant 0 : index
    %c0_3 = arith.constant 0 : index
    %4 = vector.load %arg2[%c0_2, %c0_3] : memref<8x256xf32, #tpu.memory_space<vmem>>, vector<8x256xf32>
    %c0_4 = arith.constant 0 : index
    %c0_5 = arith.constant 0 : index
    %5 = vector.load %arg3[%c0_4, %c0_5] : memref<256x25xf32, #tpu.memory_space<vmem>>, vector<256x25xf32>
    %cst = arith.constant dense<0.000000e+00> : vector<8x25xf32>
    %6 = tpu.matmul %4, %5, %cst {dimension_numbers = #tpu.dot_dimension_numbers<[1], [0], [0], [1], [0, 0, 1, 1], [], []>} : vector<8x256xf32>, vector<256x25xf32>, vector<8x25xf32> -> vector<8x25xf32>
    %7 = arith.addf %3, %6 : vector<8x25xf32>
    %c0_6 = arith.constant 0 : index
    %c0_7 = arith.constant 0 : index
    %8 = vector.load %arg5[%c0_6, %c0_7] : memref<8x25xf32, #tpu.memory_space<vmem>>, vector<8x25xf32>
    tpu.vector_store %arg5[%c0_6, %c0_7], %7 {strides = array<i32>} : memref<8x25xf32, #tpu.memory_space<vmem>>, vector<8x25xf32>,
    %c0_i32_8 = arith.constant 0 : i32
    %9 = arith.cmpi eq, %arg1, %c0_i32_8 : i32
    %10 = arith.extui %9 : i1 to i32
    %c0_i32_9 = arith.constant 0 : i32
    %11 = arith.cmpi ne, %10, %c0_i32_9 : i32
    scf.if %11 {
      %c0_10 = arith.constant 0 : index
      %c0_11 = arith.constant 0 : index
      %12 = vector.load %arg5[%c0_10, %c0_11] : memref<8x25xf32, #tpu.memory_space<vmem>>, vector<8x25xf32>
      %c0_12 = arith.constant 0 : index
      %c0_13 = arith.constant 0 : index
      %13 = vector.load %arg4[%c0_12, %c0_13] : memref<8x25xf32, #tpu.memory_space<vmem>>, vector<8x25xf32>
      tpu.vector_store %arg4[%c0_12, %c0_13], %12 {strides = array<i32>} : memref<8x25xf32, #tpu.memory_space<vmem>>, vector<8x25xf32>,
    } else {
    }
    return
  }
  func.func @transform_0(%arg0: i32, %arg1: i32) -> (i32, i32) {
    %c0_i32 = arith.constant 0 : i32
    return %arg0, %arg1 : i32, i32
  }
  func.func @transform_1(%arg0: i32, %arg1: i32) -> (i32, i32) {
    %c0_i32 = arith.constant 0 : i32
    %c0_i32_0 = arith.constant 0 : i32
    return %arg1, %c0_i32 : i32, i32
  }
  func.func @transform_2(%arg0: i32, %arg1: i32) -> (i32, i32) {
    %c0_i32 = arith.constant 0 : i32
    %c0_i32_0 = arith.constant 0 : i32
    return %arg0, %c0_i32 : i32, i32
  }
}

</mosaic_0001>

<llo_original>
// kernel: tpu_custom_call.1
$region0: #{tpu_custom_call.1}
  #allocation0 [shape = 'u32[]', space=smem, size = 0x4, offset = 0x4, fixed_abs, tag = 'smem constant byte address 0x4 - core index']
  #allocation1 [shape = 'u32[144,128]{1,0:T(1,128)}', space=vmem, size = 0x12000, scoped, tag = 'internal scratch']
  #allocation2 [shape = 'f32[8,25]{1,0:T(8,128)}', space=vmem, size = 0x1000, scoped, tag = 'scratch operand']
  %s0 = inlined_call_operand.vmem [shape: f32[8,256], index: 0, kind: input, shape index: {}]
  %s1 = inlined_call_operand.vmem [shape: f32[256,25], index: 1, kind: input, shape index: {}]
  %s2 = inlined_call_operand.hbm [shape: f32[8,25], index: 2, kind: output, shape index: {}]
  %s3 = sld [smem:[#allocation0]]
  $region26: #{tpu_custom_call.1} parent=0
    _
  %s5 = ssub.s32 1, %s3
  %s6 = scalar_select 0, %s5, %s3
  $region1: #{tpu_custom_call.1} parent=0
    #allocation3 [shape = 'u8[4096]{0}', space=vmem, size = 0x1000, scoped, tag = 'output window, operand 0, single buffered']
    #allocation4 [shape = 's32[1]{0}', space=sflag, size = 0x4, scoped, tag = 'scoped memory for tpu_custom_call.1']
    %7 = vsyncpa [#allocation4], 0
    // Predicated region
    $region2: #{tpu_custom_call.1} parent=1 // pred_check
      _
    $region3: #{tpu_custom_call.1} parent=1 // pred_check_branch
      %9 = sbr.rel (0) target = $region5
    $region4: #{tpu_custom_call.1} parent=1 // pred_region
      _
    $region5: #{tpu_custom_call.1} parent=1 // pred_fallthru
      _
    // Predicated region
    $region6: #{tpu_custom_call.1} parent=1 // pred_check
      _
    $region7: #{tpu_custom_call.1} parent=1 // pred_check_branch
      %11 = sbr.rel (0) target = $region9
    $region8: #{tpu_custom_call.1} parent=1 // pred_region
      _
    $region9: #{tpu_custom_call.1} parent=1 // pred_fallthru
      _
    %p12 = scmp.eq.s32.totalorder 0, 0
    // Predicated region
    $region10: #{tpu_custom_call.1} parent=1 // pred_check
      %p13 = pneg %p12
    $region11: #{tpu_custom_call.1} parent=1 // pred_check_branch
      %15 = sbr.rel (%p13) target = $region13
    $region12: #{tpu_custom_call.1} parent=1 // pred_region
      %vm16 = vcmask 203776
      %17 = vst.msk [vmem:[#allocation2] sm:$0xff] %vm16, 0.0
    $region13: #{tpu_custom_call.1} parent=1 // pred_fallthru
      _
    %v18 = vld [vmem:[#allocation2] sm:$0xff]
    %v19 = vld [vmem:[%s0] sm:$0xff]
    %v20 = vld [vmem:[%s0 + $0x8] sm:$0xff]
    %v21 = vld [vmem:[%s1] sm:$0xff]
    %v22 = vld [vmem:[%s1 + $0x8] sm:$0xff]
    %v23 = vld [vmem:[%s1 + $0x10] sm:$0xff]
    %v24 = vld [vmem:[%s1 + $0x18] sm:$0xff]
    %v25 = vld [vmem:[%s1 + $0x20] sm:$0xff]
    %v26 = vld [vmem:[%s1 + $0x28] sm:$0xff]
    %v27 = vld [vmem:[%s1 + $0x30] sm:$0xff]
    %v28 = vld [vmem:[%s1 + $0x38] sm:$0xff]
    %v29 = vld [vmem:[%s1 + $0x40] sm:$0xff]
    %v30 = vld [vmem:[%s1 + $0x48] sm:$0xff]
    %v31 = vld [vmem:[%s1 + $0x50] sm:$0xff]
    %v32 = vld [vmem:[%s1 + $0x58] sm:$0xff]
    %v33 = vld [vmem:[%s1 + $0x60] sm:$0xff]
    %v34 = vld [vmem:[%s1 + $0x68] sm:$0xff]
    %v35 = vld [vmem:[%s1 + $0x70] sm:$0xff]
    %v36 = vld [vmem:[%s1 + $0x78] sm:$0xff]
    %v37 = vld [vmem:[%s1 + $0x80] sm:$0xff]
    %v38 = vld [vmem:[%s1 + $0x88] sm:$0xff]
    %v39 = vld [vmem:[%s1 + $0x90] sm:$0xff]
    %v40 = vld [vmem:[%s1 + $0x98] sm:$0xff]
    %v41 = vld [vmem:[%s1 + $0xa0] sm:$0xff]
    %v42 = vld [vmem:[%s1 + $0xa8] sm:$0xff]
    %v43 = vld [vmem:[%s1 + $0xb0] sm:$0xff]
    %v44 = vld [vmem:[%s1 + $0xb8] sm:$0xff]
    %v45 = vld [vmem:[%s1 + $0xc0] sm:$0xff]
    %v46 = vld [vmem:[%s1 + $0xc8] sm:$0xff]
    %v47 = vld [vmem:[%s1 + $0xd0] sm:$0xff]
    %v48 = vld [vmem:[%s1 + $0xd8] sm:$0xff]
    %v49 = vld [vmem:[%s1 + $0xe0] sm:$0xff]
    %v50 = vld [vmem:[%s1 + $0xe8] sm:$0xff]
    %v51 = vld [vmem:[%s1 + $0xf0] sm:$0xff]
    %v52 = vld [vmem:[%s1 + $0xf8] sm:$0xff]
    %53 = vmatprep.subr.mxu0 0.0
    %54 = vmatpush1.msra.mxu0 %v36
    %55 = vmatprep.subr.mxu0 0.0
    %56 = vmatpush1.msra.mxu0 %v35
    %57 = vmatprep.subr.mxu0 0.0
    %58 = vmatpush1.msra.mxu0 %v34
    %59 = vmatprep.subr.mxu0 0.0
    %60 = vmatpush1.msra.mxu0 %v33
    %61 = vmatprep.subr.mxu0 0.0
    %62 = vmatpush1.msra.mxu0 %v32
    %63 = vmatprep.subr.mxu0 0.0
    %64 = vmatpush1.msra.mxu0 %v31
    %65 = vmatprep.subr.mxu0 0.0
    %66 = vmatpush1.msra.mxu0 %v30
    %67 = vmatprep.subr.mxu0 0.0
    %68 = vmatpush1.msra.mxu0 %v29
    %69 = vmatprep.subr.mxu0 0.0
    %70 = vmatpush1.msra.mxu0 %v28
    %71 = vmatprep.subr.mxu0 0.0
    %72 = vmatpush1.msra.mxu0 %v27
    %73 = vmatprep.subr.mxu0 0.0
    %74 = vmatpush1.msra.mxu0 %v26
    %75 = vmatprep.subr.mxu0 0.0
    %76 = vmatpush1.msra.mxu0 %v25
    %77 = vmatprep.subr.mxu0 0.0
    %78 = vmatpush1.msra.mxu0 %v24
    %79 = vmatprep.subr.mxu0 0.0
    %80 = vmatpush1.msra.mxu0 %v23
    %81 = vmatprep.subr.mxu0 0.0
    %82 = vmatpush1.msra.mxu0 %v22
    %83 = vmatprep.subr.mxu0 0.0
    %84 = vmatpush1.msra.mxu0 %v21
    %85 = vmatprep.subr.mxu0 0.0
    %86 = vmatpush2.msra.mxu0 %v52
    %87 = vmatprep.subr.mxu0 0.0
    %88 = vmatpush2.msra.mxu0 %v51
    %89 = vmatprep.subr.mxu0 0.0
    %90 = vmatpush2.msra.mxu0 %v50
    %91 = vmatprep.subr.mxu0 0.0
    %92 = vmatpush2.msra.mxu0 %v49
    %93 = vmatprep.subr.mxu0 0.0
    %94 = vmatpush2.msra.mxu0 %v48
    %95 = vmatprep.subr.mxu0 0.0
    %96 = vmatpush2.msra.mxu0 %v47
    %97 = vmatprep.subr.mxu0 0.0
    %98 = vmatpush2.msra.mxu0 %v46
    %99 = vmatprep.subr.mxu0 0.0
    %100 = vmatpush2.msra.mxu0 %v45
    %101 = vmatprep.subr.mxu0 0.0
    %102 = vmatpush2.msra.mxu0 %v44
    %103 = vmatprep.subr.mxu0 0.0
    %104 = vmatpush2.msra.mxu0 %v43
    %105 = vmatprep.subr.mxu0 0.0
    %106 = vmatpush2.msra.mxu0 %v42
    %107 = vmatprep.subr.mxu0 0.0
    %108 = vmatpush2.msra.mxu0 %v41
    %109 = vmatprep.subr.mxu0 0.0
    %110 = vmatpush2.msra.mxu0 %v40
    %111 = vmatprep.subr.mxu0 0.0
    %112 = vmatpush2.msra.mxu0 %v39
    %113 = vmatprep.subr.mxu0 0.0
    %114 = vmatpush2.msra.mxu0 %v38
    %115 = vmatprep.subr.mxu0 0.0
    %116 = vmatpush2.msra.mxu0 %v37
    %117 = vmatprep.mubr.f32.mxu0 %v20
    %118 = vmatmul.mubr.f32.gmra.mxu0 %v19
    %v119 = vpop.f32.mrf.mxu0
    %v120 = vadd.f32 0.0, %v119
    %v121 = vpop.f32.mrf.mxu0
    %122 = vdwg.mxu0
    %v123 = vadd.f32 %v18, %v120
    %vm124 = vcmask 203776
    %125 = vst.msk [vmem:[#allocation2] sm:$0xff] %vm124, %v123
    // Predicated region
    $region14: #{tpu_custom_call.1} parent=1 // pred_check
      %p126 = pneg %p12
    $region15: #{tpu_custom_call.1} parent=1 // pred_check_branch
      %128 = sbr.rel (%p126) target = $region17
    $region16: #{tpu_custom_call.1} parent=1 // pred_region
      %v129 = vld [vmem:[#allocation2] sm:$0xff]
      %130 = vst.msk [vmem:[#allocation3] sm:$0xff] %vm124, %v129
    $region17: #{tpu_custom_call.1} parent=1 // pred_fallthru
      _
    // Predicated region
    $region18: #{tpu_custom_call.1} parent=1 // pred_check
      _
    $region19: #{tpu_custom_call.1} parent=1 // pred_check_branch
      %132 = sbr.rel (0) target = $region21
    $region20: #{tpu_custom_call.1} parent=1 // pred_region
      %s134 = ssub.s32 128, 128
      %135 = vsyncadd [#allocation4], %s134
      %s137 = sshll.u32 [#allocation3], 4
      %s138 = int_to_ptr.vmem [resolvable:$true] %s137
      %140 = dma.vmem_to_hbm [thread:$0]  %s138, 128, %s2, [#allocation4]
    $region21: #{tpu_custom_call.1} parent=1 // pred_fallthru
      _
    // Predicated region
    $region22: #{tpu_custom_call.1} parent=1 // pred_check
      _
    $region23: #{tpu_custom_call.1} parent=1 // pred_check_branch
      %142 = sbr.rel (0) target = $region25
    $region24: #{tpu_custom_call.1} parent=1 // pred_region
      %143 = dma.done [#allocation4], 128
    $region25: #{tpu_custom_call.1} parent=1 // pred_fallthru
      _
    %144 = vsyncpa [#allocation4], 1

</llo_original>
